<compile_context>
chip_gen: v7x
topology: tpu7x:2x2x1
jax: 0.10.0
libtpu: 0.0.40
codegen_flags: <defaults>
</compile_context>

<pallas_src>
import functools

import jax
import jax.numpy as jnp
from jax.experimental import pallas as pl
from jax.experimental.pallas import tpu as pltpu

N_ACTIONS = 8
IMAGE_SIZE = 16
N_STATES = 2 + IMAGE_SIZE * IMAGE_SIZE  # 258
HIDDEN = 10

H_PAD = 128            # hidden 10 -> 128 (zero filled): lane-dense bias/ReLU
DEFAULT_TILE_B = 2048  # rows per grid step; ~4.2 MiB double-buffered x tile


def _round_up(n, m):
    return ((n + m - 1) // m) * m


def net_kernel(x_ref, w1_ref, b1_ref, w2_ref, b2_ref, o_ref):
    # fc1: (tb, 258) f32 @ (258, 128) f32 -> f32 on the MXU (K=258 padded
    # internally by Mosaic); padded hidden lanes contribute exactly 0.
    h = jnp.dot(x_ref[...], w1_ref[...], preferred_element_type=jnp.float32)
    # Full-width (1, 128) bias -> single unmasked VPU add; ReLU.
    h = jnp.maximum(h + b1_ref[...], 0.0)
    # out: (tb, 128) @ (128, 8) -> (tb, 8); narrow-N handled by MXU masking.
    out = jnp.dot(h, w2_ref[...], preferred_element_type=jnp.float32)
    # Direct (tb, 8) store — no padded lanes, no post-call slice.
    o_ref[...] = (out + b2_ref[...]).astype(o_ref.dtype)


def prepare_params(w1, b1, w2, b2):
    """Pad only the hidden dim (10 -> 128) with zeros; keep K=258, N=8 exact."""
    w1_p = jnp.zeros((N_STATES, H_PAD), jnp.float32).at[:, :HIDDEN].set(w1)
    b1_p = jnp.zeros((1, H_PAD), jnp.float32).at[:, :HIDDEN].set(b1)
    w2_p = jnp.zeros((H_PAD, N_ACTIONS), jnp.float32).at[:HIDDEN, :].set(w2)
    b2_p = jnp.asarray(b2, jnp.float32).reshape(1, N_ACTIONS)
    return w1_p, b1_p, w2_p, b2_p


@functools.partial(jax.jit, static_argnames=("tile_b",))
def net_forward(x, w1_p, b1_p, w2_p, b2_p, *, tile_b=DEFAULT_TILE_B):
    """x: (B, N_STATES) f32 -> (B, N_ACTIONS) f32."""
    B = x.shape[0]

    tb = _round_up(min(tile_b, B), 8)
    if B > 512:
        # Keep >= 2 grid steps so v7x's second TensorCore gets work
        # (dimension_semantics=("parallel",)); harmless on v5e/v6e.
        tb = min(tb, _round_up(pl.cdiv(B, 2), 8))
    grid = (pl.cdiv(B, tb),)

    flops = 2 * B * (N_STATES * HIDDEN + HIDDEN * N_ACTIONS)
    bytes_accessed = (B * N_STATES * 4            # x (f32, unpadded)
                      + N_STATES * H_PAD * 4      # w1 (f32, hidden-padded)
                      + H_PAD * N_ACTIONS * 4     # w2
                      + (H_PAD + N_ACTIONS) * 4   # biases
                      + B * N_ACTIONS * 4)        # output (8-wide, unpadded)

    return pl.pallas_call(
        net_kernel,
        out_shape=jax.ShapeDtypeStruct((B, N_ACTIONS), jnp.float32),
        grid=grid,
        in_specs=[
            pl.BlockSpec((tb, N_STATES), lambda i: (i, 0)),      # batch-tiled x
            pl.BlockSpec((N_STATES, H_PAD), lambda i: (0, 0)),   # VMEM-resident w1
            pl.BlockSpec((1, H_PAD), lambda i: (0, 0)),          # b1
            pl.BlockSpec((H_PAD, N_ACTIONS), lambda i: (0, 0)),  # w2
            pl.BlockSpec((1, N_ACTIONS), lambda i: (0, 0)),      # b2
        ],
        out_specs=pl.BlockSpec((tb, N_ACTIONS), lambda i: (i, 0)),
        compiler_params=pltpu.CompilerParams(
            dimension_semantics=("parallel",)),                  # megacore on v7x
        cost_estimate=pl.CostEstimate(
            flops=flops, transcendentals=0, bytes_accessed=bytes_accessed),
    )(x, w1_p, b1_p, w2_p, b2_p)


def init_params(key):
    k1, k2, k3, k4 = jax.random.split(key, 4)
    # Weights ~ Normal(0, 0.1) as in the PyTorch __init__ (data.normal_(0, 0.1)).
    w1 = 0.1 * jax.random.normal(k1, (N_STATES, HIDDEN), dtype=jnp.float32)
    w2 = 0.1 * jax.random.normal(k2, (HIDDEN, N_ACTIONS), dtype=jnp.float32)
    # Biases: PyTorch default Linear bias init U(-1/sqrt(fan_in), 1/sqrt(fan_in)).
    bound1 = 1.0 / jnp.sqrt(jnp.float32(N_STATES))
    bound2 = 1.0 / jnp.sqrt(jnp.float32(HIDDEN))
    b1 = jax.random.uniform(k3, (1, HIDDEN), jnp.float32, -bound1, bound1)
    b2 = jax.random.uniform(k4, (1, N_ACTIONS), jnp.float32, -bound2, bound2)
    return w1, b1, w2, b2


def reference_forward(x, w1, b1, w2, b2):
    h = jnp.maximum(x @ w1 + b1, 0.0)
    return h @ w2 + b2


if __name__ == "__main__":
    key = jax.random.PRNGKey(0)
    kx, kp = jax.random.split(key)

    w1, b1, w2, b2 = init_params(kp)
    w1_p, b1_p, w2_p, b2_p = prepare_params(w1, b1, w2, b2)

    # Small action-selection batch and a larger replay-buffer batch; the latter
    # exercises the >=2-step grid and a partial last tile with the (tb, 8)
    # output block.
    for B in (2, 1000):
        x = jax.random.normal(jax.random.fold_in(kx, B), (B, N_STATES),
                              dtype=jnp.float32)
        actions_value = jax.block_until_ready(
            net_forward(x, w1_p, b1_p, w2_p, b2_p))
        ref = reference_forward(x, w1, b1, w2, b2)
        assert actions_value.shape == (B, N_ACTIONS)
        # f32 activations/weights throughout; tolerance covers MXU pass-level
        # rounding over the 258-long contraction.
        assert jnp.allclose(actions_value, ref, atol=2e-2, rtol=2e-2)

    print("KERNEL_OK")
</pallas_src>

<mosaic_0001>
module attributes {stable_mosaic.version = 11 : i64} {
  func.func @net_kernel(%arg0: i32, %arg1: memref<8x258xf32, #tpu.memory_space<vmem>>, %arg2: memref<258x128xf32, #tpu.memory_space<vmem>>, %arg3: memref<1x128xf32, #tpu.memory_space<vmem>>, %arg4: memref<128x8xf32, #tpu.memory_space<vmem>>, %arg5: memref<1x8xf32, #tpu.memory_space<vmem>>, %arg6: memref<8x8xf32, #tpu.memory_space<vmem>>) attributes {dimension_semantics = [#tpu.dimension_semantics<parallel>], iteration_bounds = array<i64: 1>, scalar_prefetch = 0 : i64, scratch_operands = 0 : i64, tpu.core_type = #tpu.core_type<tc>, window_params = [{transform_indices = @transform_0, window_bounds = array<i64: 8, 258>}, {pipeline_mode = #tpu.pipeline_mode<synchronous>, transform_indices = @transform_1, window_bounds = array<i64: 258, 128>}, {pipeline_mode = #tpu.pipeline_mode<synchronous>, transform_indices = @transform_2, window_bounds = array<i64: 1, 128>}, {pipeline_mode = #tpu.pipeline_mode<synchronous>, transform_indices = @transform_3, window_bounds = array<i64: 128, 8>}, {pipeline_mode = #tpu.pipeline_mode<synchronous>, transform_indices = @transform_4, window_bounds = array<i64: 1, 8>}, {transform_indices = @transform_5, window_bounds = array<i64: 8, 8>}]} {
    %c0 = arith.constant 0 : index
    %c0_0 = arith.constant 0 : index
    %0 = vector.load %arg1[%c0, %c0_0] : memref<8x258xf32, #tpu.memory_space<vmem>>, vector<8x258xf32>
    %c0_1 = arith.constant 0 : index
    %c0_2 = arith.constant 0 : index
    %1 = vector.load %arg2[%c0_1, %c0_2] : memref<258x128xf32, #tpu.memory_space<vmem>>, vector<258x128xf32>
    %cst = arith.constant dense<0.000000e+00> : vector<8x128xf32>
    %2 = tpu.matmul %0, %1, %cst {dimension_numbers = #tpu.dot_dimension_numbers<[1], [0], [0], [1], [0, 0, 1, 1], [], []>} : vector<8x258xf32>, vector<258x128xf32>, vector<8x128xf32> -> vector<8x128xf32>
    %c0_3 = arith.constant 0 : index
    %c0_4 = arith.constant 0 : index
    %3 = vector.load %arg3[%c0_3, %c0_4] : memref<1x128xf32, #tpu.memory_space<vmem>>, vector<1x128xf32>
    %4 = vector.broadcast %3 : vector<1x128xf32> to vector<8x128xf32>
    %5 = arith.addf %2, %4 : vector<8x128xf32>
    %cst_5 = arith.constant 0.000000e+00 : f32
    %6 = vector.broadcast %cst_5 : f32 to vector<8x128xf32>
    %7 = arith.maximumf %5, %6 : vector<8x128xf32>
    %c0_6 = arith.constant 0 : index
    %c0_7 = arith.constant 0 : index
    %8 = vector.load %arg4[%c0_6, %c0_7] : memref<128x8xf32, #tpu.memory_space<vmem>>, vector<128x8xf32>
    %cst_8 = arith.constant dense<0.000000e+00> : vector<8x8xf32>
    %9 = tpu.matmul %7, %8, %cst_8 {dimension_numbers = #tpu.dot_dimension_numbers<[1], [0], [0], [1], [0, 0, 1, 1], [], []>} : vector<8x128xf32>, vector<128x8xf32>, vector<8x8xf32> -> vector<8x8xf32>
    %c0_9 = arith.constant 0 : index
    %c0_10 = arith.constant 0 : index
    %10 = vector.load %arg5[%c0_9, %c0_10] : memref<1x8xf32, #tpu.memory_space<vmem>>, vector<1x8xf32>
    %11 = vector.broadcast %10 : vector<1x8xf32> to vector<8x8xf32>
    %12 = arith.addf %9, %11 : vector<8x8xf32>
    %c0_11 = arith.constant 0 : index
    %c0_12 = arith.constant 0 : index
    %13 = vector.load %arg6[%c0_11, %c0_12] : memref<8x8xf32, #tpu.memory_space<vmem>>, vector<8x8xf32>
    tpu.vector_store %arg6[%c0_11, %c0_12], %12 {strides = array<i32>} : memref<8x8xf32, #tpu.memory_space<vmem>>, vector<8x8xf32>,
    return
  }
  func.func @transform_0(%arg0: i32) -> (i32, i32) {
    %c0_i32 = arith.constant 0 : i32
    %c0_i32_0 = arith.constant 0 : i32
    return %arg0, %c0_i32 : i32, i32
  }
  func.func @transform_1(%arg0: i32) -> (i32, i32) {
    %c0_i32 = arith.constant 0 : i32
    %c0_i32_0 = arith.constant 0 : i32
    %c0_i32_1 = arith.constant 0 : i32
    return %c0_i32, %c0_i32_0 : i32, i32
  }
  func.func @transform_2(%arg0: i32) -> (i32, i32) {
    %c0_i32 = arith.constant 0 : i32
    %c0_i32_0 = arith.constant 0 : i32
    %c0_i32_1 = arith.constant 0 : i32
    return %c0_i32, %c0_i32_0 : i32, i32
  }
  func.func @transform_3(%arg0: i32) -> (i32, i32) {
    %c0_i32 = arith.constant 0 : i32
    %c0_i32_0 = arith.constant 0 : i32
    %c0_i32_1 = arith.constant 0 : i32
    return %c0_i32, %c0_i32_0 : i32, i32
  }
  func.func @transform_4(%arg0: i32) -> (i32, i32) {
    %c0_i32 = arith.constant 0 : i32
    %c0_i32_0 = arith.constant 0 : i32
    %c0_i32_1 = arith.constant 0 : i32
    return %c0_i32, %c0_i32_0 : i32, i32
  }
  func.func @transform_5(%arg0: i32) -> (i32, i32) {
    %c0_i32 = arith.constant 0 : i32
    %c0_i32_0 = arith.constant 0 : i32
    return %arg0, %c0_i32 : i32, i32
  }
}

</mosaic_0001>

<llo_original>
// kernel: net_forward.1
$region0: #{net_forward.1}
  #allocation0 [shape = 'u32[]', space=smem, size = 0x4, offset = 0x4, fixed_abs, tag = 'smem constant byte address 0x4 - core index']
  #allocation1 [shape = 'u32[144,128]{1,0:T(1,128)}', space=vmem, size = 0x12000, scoped, tag = 'internal scratch']
  %s0 = inlined_call_operand.vmem [shape: f32[2,258], index: 0, kind: input, shape index: {}]
  %s1 = inlined_call_operand.hbm [shape: f32[258,128], index: 1, kind: input, shape index: {}]
  %s2 = inlined_call_operand.vmem [shape: f32[1,128], index: 2, kind: input, shape index: {}]
  %s3 = inlined_call_operand.vmem [shape: f32[128,8], index: 3, kind: input, shape index: {}]
  %s4 = inlined_call_operand.vmem [shape: f32[1,8], index: 4, kind: input, shape index: {}]
  %s5 = inlined_call_operand.hbm [shape: f32[2,8], index: 5, kind: output, shape index: {}]
  %s6 = sld [smem:[#allocation0]]
  $region34: #{net_forward.1} parent=0
    _
  %s8 = ssub.s32 1, %s6
  %s9 = scalar_select 0, %s8, %s6
  $region1: #{net_forward.1} parent=0
    #allocation2 [shape = 'u8[135168]{0}', space=vmem, size = 0x21000, scoped, tag = 'input window, operand 1, single buffered']
    #allocation3 [shape = 's32[1]{0}', space=sflag, size = 0x4, scoped, tag = 'scoped memory for net_forward.1']
    #allocation4 [shape = 's32[1]{0}', space=sflag, size = 0x4, scoped, tag = 'scoped memory for net_forward.1']
    #allocation5 [shape = 'u8[4096]{0}', space=vmem, size = 0x1000, scoped, tag = 'output window, operand 0, single buffered']
    %10 = vsyncpa [#allocation3], 0
    %11 = vsyncpa [#allocation4], 0
    // Predicated region
    $region2: #{net_forward.1} parent=1 // pred_check
      _
    $region3: #{net_forward.1} parent=1 // pred_check_branch
      %13 = sbr.rel (0) target = $region5
    $region4: #{net_forward.1} parent=1 // pred_region
      _
    $region5: #{net_forward.1} parent=1 // pred_fallthru
      _
    // Predicated region
    $region6: #{net_forward.1} parent=1 // pred_check
      _
    $region7: #{net_forward.1} parent=1 // pred_check_branch
      %15 = sbr.rel (0) target = $region9
    $region8: #{net_forward.1} parent=1 // pred_region
      %s17 = ssub.s32 4224, 4224
      %18 = vsyncadd [#allocation3], %s17
      %s19 = sshll.u32 [#allocation2], 4
      %s20 = int_to_ptr.vmem [resolvable:$true] %s19
      %25 = dma.hbm_to_vmem [thread:$0]  %s1, 4224, %s20, [#allocation3], 128, 128, 8
    $region9: #{net_forward.1} parent=1 // pred_fallthru
      _
    // Predicated region
    $region10: #{net_forward.1} parent=1 // pred_check
      _
    $region11: #{net_forward.1} parent=1 // pred_check_branch
      %27 = sbr.rel (0) target = $region13
    $region12: #{net_forward.1} parent=1 // pred_region
      _
    $region13: #{net_forward.1} parent=1 // pred_fallthru
      _
    // Predicated region
    $region14: #{net_forward.1} parent=1 // pred_check
      _
    $region15: #{net_forward.1} parent=1 // pred_check_branch
      %29 = sbr.rel (0) target = $region17
    $region16: #{net_forward.1} parent=1 // pred_region
      _
    $region17: #{net_forward.1} parent=1 // pred_fallthru
      _
    // Predicated region
    $region18: #{net_forward.1} parent=1 // pred_check
      _
    $region19: #{net_forward.1} parent=1 // pred_check_branch
      %31 = sbr.rel (0) target = $region21
    $region20: #{net_forward.1} parent=1 // pred_region
      _
    $region21: #{net_forward.1} parent=1 // pred_fallthru
      _
    // Predicated region
    $region22: #{net_forward.1} parent=1 // pred_check
      _
    $region23: #{net_forward.1} parent=1 // pred_check_branch
      %33 = sbr.rel (0) target = $region25
    $region24: #{net_forward.1} parent=1 // pred_region
      %34 = dma.done [#allocation3], 4224
    $region25: #{net_forward.1} parent=1 // pred_fallthru
      _
    %v35 = vld [vmem:[%s0] sm:$0x3f]
    %v36 = vld [vmem:[%s0 + $0x6] sm:$0x3f]
    %v37 = vld [vmem:[%s0 + $0xc] sm:$0x3f]
    %v38 = vld [vmem:[%s0 + $0x12] sm:$0x3f]
    %v39 = vld [vmem:[#allocation2] sm:$0xff]
    %v40 = vld [vmem:[#allocation2 + $0x8] sm:$0xff]
    %v41 = vld [vmem:[#allocation2 + $0x10] sm:$0xff]
    %v42 = vld [vmem:[#allocation2 + $0x18] sm:$0xff]
    %v43 = vld [vmem:[#allocation2 + $0x20] sm:$0xff]
    %v44 = vld [vmem:[#allocation2 + $0x28] sm:$0xff]
    %v45 = vld [vmem:[#allocation2 + $0x30] sm:$0xff]
    %v46 = vld [vmem:[#allocation2 + $0x38] sm:$0xff]
    %v47 = vld [vmem:[#allocation2 + $0x40] sm:$0xff]
    %v48 = vld [vmem:[#allocation2 + $0x48] sm:$0xff]
    %v49 = vld [vmem:[#allocation2 + $0x50] sm:$0xff]
    %v50 = vld [vmem:[#allocation2 + $0x58] sm:$0xff]
    %v51 = vld [vmem:[#allocation2 + $0x60] sm:$0xff]
    %v52 = vld [vmem:[#allocation2 + $0x68] sm:$0xff]
    %v53 = vld [vmem:[#allocation2 + $0x70] sm:$0xff]
    %v54 = vld [vmem:[#allocation2 + $0x78] sm:$0xff]
    %v55 = vld [vmem:[#allocation2 + $0x80] sm:$0xff]
    %v56 = vld [vmem:[#allocation2 + $0x88] sm:$0xff]
    %v57 = vld [vmem:[#allocation2 + $0x90] sm:$0xff]
    %v58 = vld [vmem:[#allocation2 + $0x98] sm:$0xff]
    %v59 = vld [vmem:[#allocation2 + $0xa0] sm:$0xff]
    %v60 = vld [vmem:[#allocation2 + $0xa8] sm:$0xff]
    %v61 = vld [vmem:[#allocation2 + $0xb0] sm:$0xff]
    %v62 = vld [vmem:[#allocation2 + $0xb8] sm:$0xff]
    %v63 = vld [vmem:[#allocation2 + $0xc0] sm:$0xff]
    %v64 = vld [vmem:[#allocation2 + $0xc8] sm:$0xff]
    %v65 = vld [vmem:[#allocation2 + $0xd0] sm:$0xff]
    %v66 = vld [vmem:[#allocation2 + $0xd8] sm:$0xff]
    %v67 = vld [vmem:[#allocation2 + $0xe0] sm:$0xff]
    %v68 = vld [vmem:[#allocation2 + $0xe8] sm:$0xff]
    %v69 = vld [vmem:[#allocation2 + $0xf0] sm:$0xff]
    %v70 = vld [vmem:[#allocation2 + $0xf8] sm:$0xff]
    %v71 = vld [vmem:[#allocation2 + $0x100] sm:$0x3]
    %v72 = vld [vmem:[%s2] sm:$0x1]
    %v74 = vlaneseq
    %v75 = vshrl.u32 %v74, 7
    %v76 = vsub.s32 0, %v75
    %v77 = vrot.slane %v72, %v76
    %v83 = vcombine.low %v35, %v36
    %v84 = vcombine.high %v35, %v36
    %v85 = vcombine.low %v37, %v38
    %v86 = vcombine.high %v37, %v38
    %v88 = vunpack.c.l.s4 1983009808
    %v89 = vunpack.c.0.s8 %v88
    %v90 = vlaneseq
    %v91 = vshrl.u32 %v90, 7
    %v92 = vsub.s32 %v89, %v91
    %v93 = vrot.slane %v83, %v92
    %v95 = vunpack.c.l.s4 1983009808
    %v96 = vunpack.c.0.s8 %v95
    %v97 = vlaneseq
    %v98 = vshrl.u32 %v97, 7
    %v99 = vsub.s32 %v96, %v98
    %v100 = vrot.slane %v84, %v99
    %v102 = vunpack.c.l.s4 1983009808
    %v103 = vunpack.c.0.s8 %v102
    %v104 = vlaneseq
    %v105 = vshrl.u32 %v104, 7
    %v106 = vsub.s32 %v103, %v105
    %v107 = vrot.slane %v85, %v106
    %v109 = vunpack.c.l.s4 1983009808
    %v110 = vunpack.c.0.s8 %v109
    %v111 = vlaneseq
    %v112 = vshrl.u32 %v111, 7
    %v113 = vsub.s32 %v110, %v112
    %v114 = vrot.slane %v86, %v113
    %v115 = vcombine.low %v93, %v107
    %v116 = vcombine.high %v93, %v107
    %v117 = vcombine.low %v100, %v114
    %vm120 = vcmask 15360
    %v121 = vsel %vm120, %v117, 0
    %vm123 = vcmask 1041408
    %v125 = vsel %vm123, %v71, 0
    %127 = vmatprep.subr.mxu0 0.0
    %128 = vmatpush1.msra.mxu0 %v39
    %129 = vmatprep.subr.mxu0 0.0
    %130 = vmatpush1.msra.mxu0 %v40
    %131 = vmatprep.subr.mxu0 0.0
    %132 = vmatpush1.msra.mxu0 %v41
    %133 = vmatprep.subr.mxu0 0.0
    %134 = vmatpush1.msra.mxu0 %v42
    %135 = vmatprep.subr.mxu0 0.0
    %136 = vmatpush1.msra.mxu0 %v43
    %137 = vmatprep.subr.mxu0 0.0
    %138 = vmatpush1.msra.mxu0 %v44
    %139 = vmatprep.subr.mxu0 0.0
    %140 = vmatpush1.msra.mxu0 %v45
    %141 = vmatprep.subr.mxu0 0.0
    %142 = vmatpush1.msra.mxu0 %v46
    %143 = vmatprep.subr.mxu0 0.0
    %144 = vmatpush1.msra.mxu0 %v47
    %145 = vmatprep.subr.mxu0 0.0
    %146 = vmatpush1.msra.mxu0 %v48
    %147 = vmatprep.subr.mxu0 0.0
    %148 = vmatpush1.msra.mxu0 %v49
    %149 = vmatprep.subr.mxu0 0.0
    %150 = vmatpush1.msra.mxu0 %v50
    %151 = vmatprep.subr.mxu0 0.0
    %152 = vmatpush1.msra.mxu0 %v51
    %153 = vmatprep.subr.mxu0 0.0
    %154 = vmatpush1.msra.mxu0 %v52
    %155 = vmatprep.subr.mxu0 0.0
    %156 = vmatpush1.msra.mxu0 %v53
    %157 = vmatprep.subr.mxu0 0.0
    %158 = vmatpush1.msra.mxu0 %v54
    %159 = vmatprep.subr.mxu0 0.0
    %160 = vmatpush1.msra.mxu0 %v55
    %161 = vmatprep.subr.mxu0 0.0
    %162 = vmatpush1.msra.mxu0 %v56
    %163 = vmatprep.subr.mxu0 0.0
    %164 = vmatpush1.msra.mxu0 %v57
    %165 = vmatprep.subr.mxu0 0.0
    %166 = vmatpush1.msra.mxu0 %v58
    %167 = vmatprep.subr.mxu0 0.0
    %168 = vmatpush1.msra.mxu0 %v59
    %169 = vmatprep.subr.mxu0 0.0
    %170 = vmatpush1.msra.mxu0 %v60
    %171 = vmatprep.subr.mxu0 0.0
    %172 = vmatpush1.msra.mxu0 %v61
    %173 = vmatprep.subr.mxu0 0.0
    %174 = vmatpush1.msra.mxu0 %v62
    %175 = vmatprep.subr.mxu0 0.0
    %176 = vmatpush1.msra.mxu0 %v63
    %177 = vmatprep.subr.mxu0 0.0
    %178 = vmatpush1.msra.mxu0 %v64
    %179 = vmatprep.subr.mxu0 0.0
    %180 = vmatpush1.msra.mxu0 %v65
    %181 = vmatprep.subr.mxu0 0.0
    %182 = vmatpush1.msra.mxu0 %v66
    %183 = vmatprep.subr.mxu0 0.0
    %184 = vmatpush1.msra.mxu0 %v67
    %185 = vmatprep.subr.mxu0 0.0
    %186 = vmatpush1.msra.mxu0 %v68
    %187 = vmatprep.subr.mxu0 0.0
    %188 = vmatpush1.msra.mxu0 %v69
    %189 = vmatprep.subr.mxu0 0.0
    %190 = vmatpush1.msra.mxu0 %v70
    %191 = vmatprep.mubr.f32.mxu0 %v116
    %192 = vmatmul.mubr.f32.gmra.mrb[0].mxu0 %v115
    %v193 = vpop.f32.mrb[0].mxu0
    %v194 = vadd.f32 %v77, %v193
    %v195 = vpop.f32.mrb[0].mxu0
    %196 = vdwg.mxu0
    %197 = vmatprep.subr.mxu0 0.0
    %198 = vmatpush1.msra.mxu0 %v125
    %199 = vmatprep.subr.mxu0 0.0
    %200 = vmatpush1.msra.mxu0 0.0
    %201 = vmatprep.subr.mxu0 0.0
    %202 = vmatpush1.msra.mxu0 0.0
    %203 = vmatprep.subr.mxu0 0.0
    %204 = vmatpush1.msra.mxu0 0.0
    %205 = vmatprep.subr.mxu0 0.0
    %206 = vmatpush1.msra.mxu0 0.0
    %207 = vmatprep.subr.mxu0 0.0
    %208 = vmatpush1.msra.mxu0 0.0
    %209 = vmatprep.subr.mxu0 0.0
    %210 = vmatpush1.msra.mxu0 0.0
    %211 = vmatprep.subr.mxu0 0.0
    %212 = vmatpush1.msra.mxu0 0.0
    %213 = vmatprep.subr.mxu0 0.0
    %214 = vmatpush1.msra.mxu0 0.0
    %215 = vmatprep.subr.mxu0 0.0
    %216 = vmatpush1.msra.mxu0 0.0
    %217 = vmatprep.subr.mxu0 0.0
    %218 = vmatpush1.msra.mxu0 0.0
    %219 = vmatprep.subr.mxu0 0.0
    %220 = vmatpush1.msra.mxu0 0.0
    %221 = vmatprep.subr.mxu0 0.0
    %222 = vmatpush1.msra.mxu0 0.0
    %223 = vmatprep.subr.mxu0 0.0
    %224 = vmatpush1.msra.mxu0 0.0
    %225 = vmatprep.subr.mxu0 0.0
    %226 = vmatpush1.msra.mxu0 0.0
    %227 = vmatprep.subr.mxu0 0.0
    %228 = vmatpush1.msra.mxu0 0.0
    %229 = vmatprep.subr.mxu0 0.0
    %230 = vmatpush1.msra.mxu0 0.0
    %231 = vmatprep.subr.mxu0 0.0
    %232 = vmatpush1.msra.mxu0 0.0
    %233 = vmatprep.subr.mxu0 0.0
    %234 = vmatpush1.msra.mxu0 0.0
    %235 = vmatprep.subr.mxu0 0.0
    %236 = vmatpush1.msra.mxu0 0.0
    %237 = vmatprep.subr.mxu0 0.0
    %238 = vmatpush1.msra.mxu0 0.0
    %239 = vmatprep.subr.mxu0 0.0
    %240 = vmatpush1.msra.mxu0 0.0
    %241 = vmatprep.subr.mxu0 0.0
    %242 = vmatpush1.msra.mxu0 0.0
    %243 = vmatprep.subr.mxu0 0.0
    %244 = vmatpush1.msra.mxu0 0.0
    %245 = vmatprep.subr.mxu0 0.0
    %246 = vmatpush1.msra.mxu0 0.0
    %247 = vmatprep.subr.mxu0 0.0
    %248 = vmatpush1.msra.mxu0 0.0
    %249 = vmatprep.subr.mxu0 0.0
    %250 = vmatpush1.msra.mxu0 0.0
    %251 = vmatprep.subr.mxu0 0.0
    %252 = vmatpush1.msra.mxu0 0.0
    %253 = vmatprep.subr.mxu0 0.0
    %254 = vmatpush1.msra.mxu0 0.0
    %255 = vmatprep.subr.mxu0 0.0
    %256 = vmatpush1.msra.mxu0 0.0
    %257 = vmatprep.subr.mxu0 0.0
    %258 = vmatpush1.msra.mxu0 0.0
    %259 = vmatprep.subr.mxu0 0.0
    %260 = vmatpush1.msra.mxu0 0.0
    %261 = vmatprep.mubr.f32.mxu0 0.0
    %262 = vmatmul.mubr.f32.gmra.mrb[0].mxu0 %v121
    %v263 = vpop.f32.mrb[0].mxu0
    %v264 = vadd.f32 %v194, %v263
    %v265 = vpop.f32.mrb[0].mxu0
    %266 = vdwg.mxu0
    %v267 = vmax.f32 %v264, 0.0
    %v268 = vld [vmem:[%s3] sm:$0xff]
    %v269 = vld [vmem:[%s3 + $0x8] sm:$0xff]
    %v270 = vld [vmem:[%s3 + $0x10] sm:$0xff]
    %v271 = vld [vmem:[%s3 + $0x18] sm:$0xff]
    %v272 = vld [vmem:[%s3 + $0x20] sm:$0xff]
    %v273 = vld [vmem:[%s3 + $0x28] sm:$0xff]
    %v274 = vld [vmem:[%s3 + $0x30] sm:$0xff]
    %v275 = vld [vmem:[%s3 + $0x38] sm:$0xff]
    %v276 = vld [vmem:[%s3 + $0x40] sm:$0xff]
    %v277 = vld [vmem:[%s3 + $0x48] sm:$0xff]
    %v278 = vld [vmem:[%s3 + $0x50] sm:$0xff]
    %v279 = vld [vmem:[%s3 + $0x58] sm:$0xff]
    %v280 = vld [vmem:[%s3 + $0x60] sm:$0xff]
    %v281 = vld [vmem:[%s3 + $0x68] sm:$0xff]
    %v282 = vld [vmem:[%s3 + $0x70] sm:$0xff]
    %v283 = vld [vmem:[%s3 + $0x78] sm:$0xff]
    %v284 = vld [vmem:[%s4] sm:$0x1]
    %v286 = vlaneseq
    %v287 = vshrl.u32 %v286, 7
    %v288 = vsub.s32 0, %v287
    %v289 = vrot.slane %v284, %v288
    %291 = vmatprep.subr.mxu0 0.0
    %292 = vmatpush1.msra.mxu0 %v268
    %293 = vmatprep.subr.mxu0 0.0
    %294 = vmatpush1.msra.mxu0 %v269
    %295 = vmatprep.subr.mxu0 0.0
    %296 = vmatpush1.msra.mxu0 %v270
    %297 = vmatprep.subr.mxu0 0.0
    %298 = vmatpush1.msra.mxu0 %v271
    %299 = vmatprep.subr.mxu0 0.0
    %300 = vmatpush1.msra.mxu0 %v272
    %301 = vmatprep.subr.mxu0 0.0
    %302 = vmatpush1.msra.mxu0 %v273
    %303 = vmatprep.subr.mxu0 0.0
    %304 = vmatpush1.msra.mxu0 %v274
    %305 = vmatprep.subr.mxu0 0.0
    %306 = vmatpush1.msra.mxu0 %v275
    %307 = vmatprep.subr.mxu0 0.0
    %308 = vmatpush1.msra.mxu0 %v276
    %309 = vmatprep.subr.mxu0 0.0
    %310 = vmatpush1.msra.mxu0 %v277
    %311 = vmatprep.subr.mxu0 0.0
    %312 = vmatpush1.msra.mxu0 %v278
    %313 = vmatprep.subr.mxu0 0.0
    %314 = vmatpush1.msra.mxu0 %v279
    %315 = vmatprep.subr.mxu0 0.0
    %316 = vmatpush1.msra.mxu0 %v280
    %317 = vmatprep.subr.mxu0 0.0
    %318 = vmatpush1.msra.mxu0 %v281
    %319 = vmatprep.subr.mxu0 0.0
    %320 = vmatpush1.msra.mxu0 %v282
    %321 = vmatprep.subr.mxu0 0.0
    %322 = vmatpush1.msra.mxu0 %v283
    %323 = vmatprep.subr.mxu0 0.0
    %324 = vmatpush1.msra.mxu0 0.0
    %325 = vmatprep.subr.mxu0 0.0
    %326 = vmatpush1.msra.mxu0 0.0
    %327 = vmatprep.subr.mxu0 0.0
    %328 = vmatpush1.msra.mxu0 0.0
    %329 = vmatprep.subr.mxu0 0.0
    %330 = vmatpush1.msra.mxu0 0.0
    %331 = vmatprep.subr.mxu0 0.0
    %332 = vmatpush1.msra.mxu0 0.0
    %333 = vmatprep.subr.mxu0 0.0
    %334 = vmatpush1.msra.mxu0 0.0
    %335 = vmatprep.subr.mxu0 0.0
    %336 = vmatpush1.msra.mxu0 0.0
    %337 = vmatprep.subr.mxu0 0.0
    %338 = vmatpush1.msra.mxu0 0.0
    %339 = vmatprep.subr.mxu0 0.0
    %340 = vmatpush1.msra.mxu0 0.0
    %341 = vmatprep.subr.mxu0 0.0
    %342 = vmatpush1.msra.mxu0 0.0
    %343 = vmatprep.subr.mxu0 0.0
    %344 = vmatpush1.msra.mxu0 0.0
    %345 = vmatprep.subr.mxu0 0.0
    %346 = vmatpush1.msra.mxu0 0.0
    %347 = vmatprep.subr.mxu0 0.0
    %348 = vmatpush1.msra.mxu0 0.0
    %349 = vmatprep.subr.mxu0 0.0
    %350 = vmatpush1.msra.mxu0 0.0
    %351 = vmatprep.subr.mxu0 0.0
    %352 = vmatpush1.msra.mxu0 0.0
    %353 = vmatprep.subr.mxu0 0.0
    %354 = vmatpush1.msra.mxu0 0.0
    %355 = vmatprep.mubr.f32.mxu0 0.0
    %356 = vmatmul.mubr.f32.gmra.mrb[0].mxu0 %v267
    %v357 = vpop.f32.mrb[0].mxu0
    %v358 = vadd.f32 %v289, %v357
    %v359 = vpop.f32.mrb[0].mxu0
    %360 = vdwg.mxu0
    %vm361 = vcmask 64512
    %362 = vst.msk [vmem:[#allocation5] sm:$0xff] %vm361, %v358
    // Predicated region
    $region26: #{net_forward.1} parent=1 // pred_check
      _
    $region27: #{net_forward.1} parent=1 // pred_check_branch
      %364 = sbr.rel (0) target = $region29
    $region28: #{net_forward.1} parent=1 // pred_region
      %s366 = ssub.s32 128, 32
      %367 = vsyncadd [#allocation4], %s366
      %s368 = sshll.u32 [#allocation5], 4
      %s369 = int_to_ptr.vmem [resolvable:$true] %s368
      %374 = dma.vmem_to_hbm [thread:$0]  %s369, 32, %s5, [#allocation4], 32, 32, 2
    $region29: #{net_forward.1} parent=1 // pred_fallthru
      _
    // Predicated region
    $region30: #{net_forward.1} parent=1 // pred_check
      _
    $region31: #{net_forward.1} parent=1 // pred_check_branch
      %376 = sbr.rel (0) target = $region33
    $region32: #{net_forward.1} parent=1 // pred_region
      %377 = dma.done [#allocation4], 128
    $region33: #{net_forward.1} parent=1 // pred_fallthru
      _
    %378 = vsyncpa [#allocation3], 1
    %379 = vsyncpa [#allocation4], 1

</llo_original>
